<compile_context>
chip_gen: v7x
topology: tpu7x:2x2x1
jax: 0.10.0
libtpu: 0.0.40
codegen_flags: <defaults>
</compile_context>

<pallas_src>
import functools

import jax
import jax.numpy as jnp
import numpy as np
from jax.experimental import pallas as pl
from jax.experimental.pallas import tpu as pltpu

EPS = 1e-5            # nn.InstanceNorm2d default eps
LRELU_SLOPE = 0.01    # F.leaky_relu default negative_slope


# ---------------------------------------------------------------------------
# Fused LeakyReLU + AdaIn Pallas kernel
# ---------------------------------------------------------------------------
def _lrelu_adain_kernel(x_ref, g_ref, b_ref, o_ref, *, negative_slope, inv_hw, eps):
    # x_ref:        (row_tile, HW)  rows are flattened (n, c) pairs, spatial on lanes
    # g_ref, b_ref: (row_tile, 1)   per-row gamma / beta (style Linear done in wrapper)
    x = x_ref[...].astype(jnp.float32)
    y = jnp.where(x >= 0.0, x, negative_slope * x)            # fused LeakyReLU

    # Single-pass per-row statistics (biased variance, f32 accumulation).
    mean = jnp.sum(y, axis=-1, keepdims=True) * inv_hw        # (rows, 1)
    ex2 = jnp.sum(y * y, axis=-1, keepdims=True) * inv_hw     # (rows, 1)
    var = jnp.maximum(ex2 - mean * mean, 0.0)                 # clamp: cancellation guard
    inv = jax.lax.rsqrt(var + eps)

    # Fold InstanceNorm + style affine into a single a*y + b elementwise pass.
    a = g_ref[...].astype(jnp.float32) * inv
    b = b_ref[...].astype(jnp.float32) - a * mean
    o_ref[...] = (a * y + b).astype(o_ref.dtype)


def _round_up(v, m):
    return (v + m - 1) // m * m


def _choose_row_tile(n_rows, hw, itemsize):
    """Sublane (row) tile: multiple of 8, block <= ~4 MiB, and >= 2 grid steps
    when there are enough rows (so v7x megacore can shard the parallel axis)."""
    max_block_bytes = 4 << 20
    bytes_per_row = max(1, hw * itemsize)
    rt = max(8, (max_block_bytes // bytes_per_row) // 8 * 8)
    rt = min(rt, _round_up(n_rows, 8))
    if rt == _round_up(n_rows, 8) and rt >= 16:
        rt = max(8, _round_up(rt // 2, 8))
    return rt


def fused_lrelu_adain(x_nchw, style, weight, bias, *,
                      negative_slope=LRELU_SLOPE, eps=EPS):
    """leaky_relu(x) followed by AdaIn(in_channel=C, latent_dim=L).

    x_nchw: (N, C, H, W); style: (N, L);
    weight: (2C, L), bias: (2C,)  -- parameters of nn.Linear(latent_dim, 2*C).
    """
    N, C, H, W = x_nchw.shape
    HW = H * W
    NC = N * C

    # Hoisted style Linear: one small XLA GEMM -> per-row gamma/beta columns.
    s = (style.astype(jnp.float32) @ weight.astype(jnp.float32).T
         + bias.astype(jnp.float32))                           # (N, 2C)
    gamma = s[:, :C].reshape(NC, 1)                            # row = n*C + c
    beta = s[:, C:].reshape(NC, 1)

    x2d = x_nchw.reshape(NC, HW)

    row_tile = _choose_row_tile(NC, HW, x2d.dtype.itemsize)
    rows = _round_up(NC, row_tile)
    if rows != NC:
        pad = rows - NC
        x2d = jnp.pad(x2d, ((0, pad), (0, 0)))
        gamma = jnp.pad(gamma, ((0, pad), (0, 0)))
        beta = jnp.pad(beta, ((0, pad), (0, 0)))

    # TODO(synk): for extremely large H*W (blocks that no longer fit v7x's 64 MiB VMEM)
    # switch to a two-pass HW-tiled variant (sum/sumsq accumulation + apply); at these
    # sizes the full-HW-resident block is the faster single-HBM-read path.
    kernel = functools.partial(_lrelu_adain_kernel,
                               negative_slope=float(negative_slope),
                               inv_hw=1.0 / HW, eps=float(eps))

    out = pl.pallas_call(
        kernel,
        out_shape=jax.ShapeDtypeStruct((rows, HW), x_nchw.dtype),
        grid=(rows // row_tile,),
        in_specs=[
            pl.BlockSpec((row_tile, HW), lambda i: (i, 0)),
            pl.BlockSpec((row_tile, 1), lambda i: (i, 0)),
            pl.BlockSpec((row_tile, 1), lambda i: (i, 0)),
        ],
        out_specs=pl.BlockSpec((row_tile, HW), lambda i: (i, 0)),
        compiler_params=pltpu.CompilerParams(
            dimension_semantics=("parallel",),
            vmem_limit_bytes=32 * 1024 * 1024),
    )(x2d, gamma, beta)

    return out[:NC].reshape(N, C, H, W)


# ---------------------------------------------------------------------------
# Convolutions (XLA) -- match PyTorch ConvTranspose2d / Conv2d, bias=False
# ---------------------------------------------------------------------------
def conv_transpose2d_nchw(x, w, *, stride, padding):
    # PyTorch nn.ConvTranspose2d semantics; weight layout (Cin, Cout, kH, kW).
    # TODO(synk): convolutions stay on XLA's conv_general_dilated; a Pallas
    # im2col + MXU conv kernel is out of scope for this block.
    kh, kw = w.shape[2], w.shape[3]
    w_oihw = jnp.flip(w, axis=(2, 3)).transpose(1, 0, 2, 3)    # (Cout, Cin, kH, kW)
    return jax.lax.conv_general_dilated(
        x, w_oihw,
        window_strides=(1, 1),
        padding=[(kh - 1 - padding, kh - 1 - padding),
                 (kw - 1 - padding, kw - 1 - padding)],
        lhs_dilation=(stride, stride),
        dimension_numbers=("NCHW", "OIHW", "NCHW"))


def conv2d_nchw(x, w, *, stride, padding):
    # PyTorch nn.Conv2d semantics; weight layout (Cout, Cin, kH, kW).
    return jax.lax.conv_general_dilated(
        x, w,
        window_strides=(stride, stride),
        padding=[(padding, padding), (padding, padding)],
        dimension_numbers=("NCHW", "OIHW", "NCHW"))


# ---------------------------------------------------------------------------
# UpConvBlock forward (normalization='adain', bias=False, no noise / pixel_norm)
# ---------------------------------------------------------------------------
def upconv_forward(x, latent, params):
    x = conv_transpose2d_nchw(x, params["conv1_w"], stride=2, padding=1)
    x = fused_lrelu_adain(x, latent, params["style1_w"], params["style1_b"])
    x = conv2d_nchw(x, params["conv2_w"], stride=1, padding=1)
    x = fused_lrelu_adain(x, latent, params["style2_w"], params["style2_b"])
    return x


# ---------------------------------------------------------------------------
# Pure-JAX reference (mirrors the PyTorch forward)
# ---------------------------------------------------------------------------
def _adain_reference(x, style, weight, bias):
    N, C, H, W = x.shape
    s = style @ weight.T + bias                       # (N, 2C)
    gamma = s[:, :C].reshape(N, C, 1, 1)
    beta = s[:, C:].reshape(N, C, 1, 1)
    mean = x.mean(axis=(2, 3), keepdims=True)
    var = x.var(axis=(2, 3), keepdims=True)           # biased, like InstanceNorm2d
    return gamma * (x - mean) / jnp.sqrt(var + EPS) + beta


def upconv_reference(x, latent, params):
    x = conv_transpose2d_nchw(x, params["conv1_w"], stride=2, padding=1)
    x = jnp.where(x >= 0.0, x, LRELU_SLOPE * x)
    x = _adain_reference(x, latent, params["style1_w"], params["style1_b"])
    x = conv2d_nchw(x, params["conv2_w"], stride=1, padding=1)
    x = jnp.where(x >= 0.0, x, LRELU_SLOPE * x)
    x = _adain_reference(x, latent, params["style2_w"], params["style2_b"])
    return x


if __name__ == "__main__":
    # UpConvBlock(nz=8, in_channel=4, out_channel=8, kernel=4, stride=2,
    #             padding=1, bias=False, normalization='adain')
    N, Cin, Cout, nz, H, W = 2, 4, 8, 8, 8, 8

    key = jax.random.PRNGKey(0)
    keys = jax.random.split(key, 8)

    x = jax.random.normal(keys[0], (N, Cin, H, W), dtype=jnp.float32)
    latent = jax.random.normal(keys[1], (N, nz), dtype=jnp.float32)

    def uniform(k, shape, fan_in):
        bound = 1.0 / np.sqrt(fan_in)
        return jax.random.uniform(k, shape, dtype=jnp.float32,
                                  minval=-bound, maxval=bound)

    params = {
        # ConvTranspose2d(Cin, Cout, 4, 2, 1, bias=False): weight (Cin, Cout, 4, 4)
        "conv1_w": uniform(keys[2], (Cin, Cout, 4, 4), Cin * 4 * 4),
        # Conv2d(Cout, Cout, 3, 1, 1, bias=False): weight (Cout, Cout, 3, 3)
        "conv2_w": uniform(keys[3], (Cout, Cout, 3, 3), Cout * 3 * 3),
        # AdaIn style Linear(nz, 2*Cout)
        "style1_w": uniform(keys[4], (2 * Cout, nz), nz),
        "style1_b": uniform(keys[5], (2 * Cout,), nz),
        "style2_w": uniform(keys[6], (2 * Cout, nz), nz),
        "style2_b": uniform(keys[7], (2 * Cout,), nz),
    }

    out = upconv_forward(x, latent, params)
    out = jax.block_until_ready(out)
    assert out.shape == (N, Cout, 2 * H, 2 * W)

    ref = upconv_reference(x, latent, params)
    np.testing.assert_allclose(np.asarray(out), np.asarray(ref),
                               rtol=1e-4, atol=1e-4)

    print("KERNEL_OK")
</pallas_src>

<mosaic_0001>
module attributes {stable_mosaic.version = 11 : i64} {
  func.func @_lrelu_adain_kernel(%arg0: i32, %arg1: memref<8x256xf32, #tpu.memory_space<vmem>>, %arg2: memref<8x1xf32, #tpu.memory_space<vmem>>, %arg3: memref<8x1xf32, #tpu.memory_space<vmem>>, %arg4: memref<8x256xf32, #tpu.memory_space<vmem>>) attributes {dimension_semantics = [#tpu.dimension_semantics<parallel>], iteration_bounds = array<i64: 2>, scalar_prefetch = 0 : i64, scratch_operands = 0 : i64, tpu.core_type = #tpu.core_type<tc>, window_params = [{transform_indices = @transform_0, window_bounds = array<i64: 8, 256>}, {transform_indices = @transform_1, window_bounds = array<i64: 8, 1>}, {transform_indices = @transform_2, window_bounds = array<i64: 8, 1>}, {transform_indices = @transform_3, window_bounds = array<i64: 8, 256>}]} {
    %c0 = arith.constant 0 : index
    %c0_0 = arith.constant 0 : index
    %0 = vector.load %arg1[%c0, %c0_0] : memref<8x256xf32, #tpu.memory_space<vmem>>, vector<8x256xf32>
    %cst = arith.constant 0.000000e+00 : f32
    %1 = vector.broadcast %cst : f32 to vector<8x256xf32>
    %2 = arith.cmpf oge, %0, %1 : vector<8x256xf32>
    %cst_1 = arith.constant 0.00999999977 : f32
    %3 = vector.broadcast %cst_1 : f32 to vector<8x256xf32>
    %4 = arith.mulf %3, %0 : vector<8x256xf32>
    %5 = arith.select %2, %0, %4 : vector<8x256xi1>, vector<8x256xf32>
    %cst_2 = arith.constant dense<0.000000e+00> : vector<8xf32>
    %6 = vector.multi_reduction <add>, %5, %cst_2 [1] : vector<8x256xf32> to vector<8xf32>
    %7 = vector.shape_cast %6 : vector<8xf32> to vector<8x1xf32>
    %cst_3 = arith.constant 3.906250e-03 : f32
    %8 = vector.broadcast %cst_3 : f32 to vector<8x1xf32>
    %9 = arith.mulf %7, %8 : vector<8x1xf32>
    %10 = arith.mulf %5, %5 : vector<8x256xf32>
    %cst_4 = arith.constant dense<0.000000e+00> : vector<8xf32>
    %11 = vector.multi_reduction <add>, %10, %cst_4 [1] : vector<8x256xf32> to vector<8xf32>
    %12 = vector.shape_cast %11 : vector<8xf32> to vector<8x1xf32>
    %cst_5 = arith.constant 3.906250e-03 : f32
    %13 = vector.broadcast %cst_5 : f32 to vector<8x1xf32>
    %14 = arith.mulf %12, %13 : vector<8x1xf32>
    %15 = arith.mulf %9, %9 : vector<8x1xf32>
    %16 = arith.subf %14, %15 : vector<8x1xf32>
    %cst_6 = arith.constant 0.000000e+00 : f32
    %17 = vector.broadcast %cst_6 : f32 to vector<8x1xf32>
    %18 = arith.maximumf %16, %17 : vector<8x1xf32>
    %cst_7 = arith.constant 9.99999974E-6 : f32
    %19 = vector.broadcast %cst_7 : f32 to vector<8x1xf32>
    %20 = arith.addf %18, %19 : vector<8x1xf32>
    %21 = math.rsqrt %20 : vector<8x1xf32>
    %c0_8 = arith.constant 0 : index
    %c0_9 = arith.constant 0 : index
    %22 = vector.load %arg2[%c0_8, %c0_9] : memref<8x1xf32, #tpu.memory_space<vmem>>, vector<8x1xf32>
    %23 = arith.mulf %22, %21 : vector<8x1xf32>
    %c0_10 = arith.constant 0 : index
    %c0_11 = arith.constant 0 : index
    %24 = vector.load %arg3[%c0_10, %c0_11] : memref<8x1xf32, #tpu.memory_space<vmem>>, vector<8x1xf32>
    %25 = arith.mulf %23, %9 : vector<8x1xf32>
    %26 = arith.subf %24, %25 : vector<8x1xf32>
    %27 = vector.broadcast %23 : vector<8x1xf32> to vector<8x256xf32>
    %28 = arith.mulf %27, %5 : vector<8x256xf32>
    %29 = vector.broadcast %26 : vector<8x1xf32> to vector<8x256xf32>
    %30 = arith.addf %28, %29 : vector<8x256xf32>
    %c0_12 = arith.constant 0 : index
    %c0_13 = arith.constant 0 : index
    %31 = vector.load %arg4[%c0_12, %c0_13] : memref<8x256xf32, #tpu.memory_space<vmem>>, vector<8x256xf32>
    tpu.vector_store %arg4[%c0_12, %c0_13], %30 {strides = array<i32>} : memref<8x256xf32, #tpu.memory_space<vmem>>, vector<8x256xf32>,
    return
  }
  func.func @transform_0(%arg0: i32) -> (i32, i32) {
    %c0_i32 = arith.constant 0 : i32
    %c0_i32_0 = arith.constant 0 : i32
    return %arg0, %c0_i32 : i32, i32
  }
  func.func @transform_1(%arg0: i32) -> (i32, i32) {
    %c0_i32 = arith.constant 0 : i32
    %c0_i32_0 = arith.constant 0 : i32
    return %arg0, %c0_i32 : i32, i32
  }
  func.func @transform_2(%arg0: i32) -> (i32, i32) {
    %c0_i32 = arith.constant 0 : i32
    %c0_i32_0 = arith.constant 0 : i32
    return %arg0, %c0_i32 : i32, i32
  }
  func.func @transform_3(%arg0: i32) -> (i32, i32) {
    %c0_i32 = arith.constant 0 : i32
    %c0_i32_0 = arith.constant 0 : i32
    return %arg0, %c0_i32 : i32, i32
  }
}

</mosaic_0001>

<llo_original>
// kernel: tpu_custom_call.1
$region0: #{tpu_custom_call.1}
  #allocation0 [shape = 'u32[]', space=smem, size = 0x4, offset = 0x4, fixed_abs, tag = 'smem constant byte address 0x4 - core index']
  #allocation1 [shape = 'u32[144,128]{1,0:T(1,128)}', space=vmem, size = 0x12000, scoped, tag = 'internal scratch']
  %s0 = inlined_call_operand.vmem [shape: f32[16,256], index: 0, kind: input, shape index: {}]
  %s1 = inlined_call_operand.vmem [shape: f32[16,1], index: 1, kind: input, shape index: {}]
  %s2 = inlined_call_operand.vmem [shape: f32[16,1], index: 2, kind: input, shape index: {}]
  %s3 = inlined_call_operand.hbm [shape: f32[16,256], index: 3, kind: output, shape index: {}]
  %s4 = sld [smem:[#allocation0]]
  $region45: #{tpu_custom_call.1} parent=0
    _
  %s6 = ssub.s32 1, %s4
  %s7 = scalar_select 0, %s6, %s4
  $region1: #{tpu_custom_call.1} parent=0
    #allocation2 [shape = 'u8[16384]{0}', space=vmem, size = 0x4000, scoped, tag = 'output window, operand 0']
    #allocation3 [shape = 's32[2]{0}', space=sflag, size = 0x8, scoped, tag = 'scoped memory for tpu_custom_call.1']
    %8 = vsyncpa [#allocation3], 0
    %s9 = scalar_lea.sflag [#allocation3], 1
    %10 = vsyncpa %s9, 0
    loop: start=0, step=1, limit=4
    $region2: #{tpu_custom_call.1} parent=1 // loop_pre_header
      _
    $region3: #{tpu_custom_call.1} parent=1 // loop_header
      %s12 = sphi 0, %s16
      %p13 = scmp.ge.s32.totalorder %s12, 4
      %s22 = sphi 0, %s24
      %s25 = sphi 0, %s22
      %s26 = sphi 0, %s25
      %s42 = sphi 0, %s26
      %s48 = sphi 0, %s50
      %s51 = sphi 0, %s48
      %s52 = sphi 0, %s51
      %s68 = sphi 0, %s52
      %s74 = sphi 0, %s76
      %s77 = sphi 0, %s74
      %s78 = sphi 0, %s77
      %s94 = sphi 0, %s78
      %s100 = sphi 0, %s102
      %s103 = sphi 0, %s100
      %s104 = sphi 0, %s103
      %s120 = sphi 0, %s104
    $region4: #{tpu_custom_call.1} parent=1 // loop_header_branch
      %15 = sbr.rel (%p13) target = $region8
    $region5: #{tpu_custom_call.1} parent=1 // loop_body
      %s17 = ssub.s32 %s12, 1
      %s18 = ssub.s32 %s12, 2
      %s19 = sadd.s32 %s12, 1
      %s20 = ssub.s32 %s12, %s19
      %p21 = scmp.eq.s32.totalorder %s20, 0
      %s23 = sadd.s32 %s22, 1
      %s24 = scalar_select %p21, %s22, %s23
      %p27 = pneg %p21
      %p28 = scmp.eq.s32.totalorder %s12, 1
      %p29 = por %p27, %p28
      %p30 = scmp.ne.s32.totalorder %s22, %s25
      %p31 = scmp.eq.s32.totalorder %s12, 0
      %p32 = por %p30, %p31
      %p33 = scmp.ne.s32.totalorder %s22, %s25
      %p34 = scmp.eq.s32.totalorder %s17, 1
      %p35 = por %p33, %p34
      %p36 = scmp.ne.s32.totalorder %s25, %s26
      %p37 = scmp.eq.s32.totalorder %s17, 0
      %p38 = por %p36, %p37
      %p39 = scmp.ne.s32.totalorder %s25, %s26
      %p40 = scmp.eq.s32.totalorder %s18, 1
      %p41 = por %p39, %p40
      %p43 = scmp.ne.s32.totalorder %s26, %s42
      %p44 = scmp.eq.s32.totalorder %s18, 0
      %p45 = por %p43, %p44
      %s46 = ssub.s32 %s12, %s19
      %p47 = scmp.eq.s32.totalorder %s46, 0
      %s49 = sadd.s32 %s48, 1
      %s50 = scalar_select %p47, %s48, %s49
      %p53 = pneg %p47
      %p54 = scmp.eq.s32.totalorder %s12, 1
      %p55 = por %p53, %p54
      %p56 = scmp.ne.s32.totalorder %s48, %s51
      %p57 = scmp.eq.s32.totalorder %s12, 0
      %p58 = por %p56, %p57
      %p59 = scmp.ne.s32.totalorder %s48, %s51
      %p60 = scmp.eq.s32.totalorder %s17, 1
      %p61 = por %p59, %p60
      %p62 = scmp.ne.s32.totalorder %s51, %s52
      %p63 = scmp.eq.s32.totalorder %s17, 0
      %p64 = por %p62, %p63
      %p65 = scmp.ne.s32.totalorder %s51, %s52
      %p66 = scmp.eq.s32.totalorder %s18, 1
      %p67 = por %p65, %p66
      %p69 = scmp.ne.s32.totalorder %s52, %s68
      %p70 = scmp.eq.s32.totalorder %s18, 0
      %p71 = por %p69, %p70
      %s72 = ssub.s32 %s12, %s19
      %p73 = scmp.eq.s32.totalorder %s72, 0
      %s75 = sadd.s32 %s74, 1
      %s76 = scalar_select %p73, %s74, %s75
      %p79 = pneg %p73
      %p80 = scmp.eq.s32.totalorder %s12, 1
      %p81 = por %p79, %p80
      %p82 = scmp.ne.s32.totalorder %s74, %s77
      %p83 = scmp.eq.s32.totalorder %s12, 0
      %p84 = por %p82, %p83
      %p85 = scmp.ne.s32.totalorder %s74, %s77
      %p86 = scmp.eq.s32.totalorder %s17, 1
      %p87 = por %p85, %p86
      %p88 = scmp.ne.s32.totalorder %s77, %s78
      %p89 = scmp.eq.s32.totalorder %s17, 0
      %p90 = por %p88, %p89
      %p91 = scmp.ne.s32.totalorder %s77, %s78
      %p92 = scmp.eq.s32.totalorder %s18, 1
      %p93 = por %p91, %p92
      %p95 = scmp.ne.s32.totalorder %s78, %s94
      %p96 = scmp.eq.s32.totalorder %s18, 0
      %p97 = por %p95, %p96
      %s98 = ssub.s32 %s12, %s19
      %p99 = scmp.eq.s32.totalorder %s98, 0
      %s101 = sadd.s32 %s100, 1
      %s102 = scalar_select %p99, %s100, %s101
      %p105 = pneg %p99
      %p106 = scmp.eq.s32.totalorder %s12, 1
      %p107 = por %p105, %p106
      %p108 = scmp.ne.s32.totalorder %s100, %s103
      %p109 = scmp.eq.s32.totalorder %s12, 0
      %p110 = por %p108, %p109
      %p111 = scmp.ne.s32.totalorder %s100, %s103
      %p112 = scmp.eq.s32.totalorder %s17, 1
      %p113 = por %p111, %p112
      %p114 = scmp.ne.s32.totalorder %s103, %s104
      %p115 = scmp.eq.s32.totalorder %s17, 0
      %p116 = por %p114, %p115
      %p117 = scmp.ne.s32.totalorder %s103, %s104
      %p118 = scmp.eq.s32.totalorder %s18, 1
      %p119 = por %p117, %p118
      %p121 = scmp.ne.s32.totalorder %s104, %s120
      %p122 = scmp.eq.s32.totalorder %s18, 0
      %p123 = por %p121, %p122
      %p124 = scmp.le.s32.totalorder 1, %s12
      %p125 = scmp.lt.s32.totalorder %s12, 3
      %p126 = pnand %p124, %p125
      %p127 = pneg %p126
      // Predicated region
      $region9: #{tpu_custom_call.1} parent=5 // pred_check
        _
      $region10: #{tpu_custom_call.1} parent=5 // pred_check_branch
        %129 = sbr.rel (%p126) target = $region12
      $region11: #{tpu_custom_call.1} parent=5 // pred_region
        %s130 = ssub.s32 %s12, 1
      $region12: #{tpu_custom_call.1} parent=5 // pred_fallthru
        _
      %p131 = scmp.lt.s32.totalorder %s12, 2
      // Predicated region
      $region13: #{tpu_custom_call.1} parent=5 // pred_check
        %p132 = pneg %p131
      $region14: #{tpu_custom_call.1} parent=5 // pred_check_branch
        %134 = sbr.rel (%p132) target = $region16
      $region15: #{tpu_custom_call.1} parent=5 // pred_region
        // Predicated region
        $region17: #{tpu_custom_call.1} parent=15 // pred_check
          %p135 = pneg %p32
        $region18: #{tpu_custom_call.1} parent=15 // pred_check_branch
          %137 = sbr.rel (%p135) target = $region20
        $region19: #{tpu_custom_call.1} parent=15 // pred_region
          %p138 = scmp.lt.s32.totalorder %s12, 1
          %s139 = scalar_select %p138, %s12, 1
          %s140 = smul.addr %s139, 2
          %s141 = smul.addr %s140, 8
          %s142 = scalar_lea.vmem %s0, %s141
        $region20: #{tpu_custom_call.1} parent=15 // pred_fallthru
          _
        // Predicated region
        $region21: #{tpu_custom_call.1} parent=15 // pred_check
          %p143 = pneg %p58
        $region22: #{tpu_custom_call.1} parent=15 // pred_check_branch
          %145 = sbr.rel (%p143) target = $region24
        $region23: #{tpu_custom_call.1} parent=15 // pred_region
          %p146 = scmp.lt.s32.totalorder %s12, 1
          %s147 = scalar_select %p146, %s12, 1
          %s148 = smul.addr %s147, 8
          %s149 = scalar_lea.vmem %s1, %s148
        $region24: #{tpu_custom_call.1} parent=15 // pred_fallthru
          _
        // Predicated region
        $region25: #{tpu_custom_call.1} parent=15 // pred_check
          %p150 = pneg %p84
        $region26: #{tpu_custom_call.1} parent=15 // pred_check_branch
          %152 = sbr.rel (%p150) target = $region28
        $region27: #{tpu_custom_call.1} parent=15 // pred_region
          %p153 = scmp.lt.s32.totalorder %s12, 1
          %s154 = scalar_select %p153, %s12, 1
          %s155 = smul.addr %s154, 8
          %s156 = scalar_lea.vmem %s2, %s155
        $region28: #{tpu_custom_call.1} parent=15 // pred_fallthru
          _
      $region16: #{tpu_custom_call.1} parent=5 // pred_fallthru
        _
      %p157 = scmp.le.s32.totalorder 1, %s12
      %p158 = scmp.lt.s32.totalorder %s12, 3
      %p159 = pnand %p157, %p158
      %p160 = pneg %p159
      // Predicated region
      $region29: #{tpu_custom_call.1} parent=5 // pred_check
        _
      $region30: #{tpu_custom_call.1} parent=5 // pred_check_branch
        %162 = sbr.rel (%p159) target = $region32
      $region31: #{tpu_custom_call.1} parent=5 // pred_region
        %s163 = ssub.s32 %s12, 1
        %p164 = scmp.lt.s32.totalorder %s17, 1
        %s165 = scalar_select %p164, %s17, 1
        %s166 = smul.addr %s165, 2
        %s167 = smul.addr %s166, 8
        %s168 = scalar_lea.vmem %s0, %s167
        %p169 = pneg %p38
        %p170 = pneg %p35
        %p171 = scmp.lt.s32.totalorder %s17, 1
        %s172 = scalar_select %p171, %s17, 1
        %s173 = smul.addr %s172, 8
        %s174 = scalar_lea.vmem %s1, %s173
        %p175 = pneg %p64
        %p176 = pneg %p61
        %p177 = scmp.lt.s32.totalorder %s17, 1
        %s178 = scalar_select %p177, %s17, 1
        %s179 = smul.addr %s178, 8
        %s180 = scalar_lea.vmem %s2, %s179
        %p181 = pneg %p90
        %p182 = pneg %p87
        %p183 = pneg %p116
        %p184 = pneg %p113
        %s185 = sand.u32 %s103, 1
        %s186 = scalar_lea.sflag [#allocation3], %s185
        %s187 = sand.u32 %s103, 1
        %s188 = smul.addr %s187, 16
        %s189 = scalar_lea.vmem [#allocation2], %s188
        %p190 = scmp.lt.s32.totalorder %s17, 1
        %s191 = scalar_select %p190, %s17, 1
        %s192 = smul.addr %s191, 2
        %s193 = smul.addr %s192, 8
        %s194 = scalar_lea.vmem %s0, %s193
        %p195 = scmp.lt.s32.totalorder %s17, 1
        %s196 = scalar_select %p195, %s17, 1
        %s197 = smul.addr %s196, 8
        %s198 = scalar_lea.vmem %s1, %s197
        %p199 = scmp.lt.s32.totalorder %s17, 1
        %s200 = scalar_select %p199, %s17, 1
        %s201 = smul.addr %s200, 8
        %s202 = scalar_lea.vmem %s2, %s201
        %v203 = vld [vmem:[%s194] sm:$0xff]
        %v204 = vld [vmem:[%s194 + $0x8] sm:$0xff]
        %vm205 = vcmp.ge.f32.partialorder %v203, 0.0
        %vm206 = vcmp.ge.f32.partialorder %v204, 0.0
        %v207 = vmul.f32 %v203, 0.01
        %v208 = vmul.f32 %v204, 0.01
        %v209 = vsel %vm205, %v203, %v207
        %v210 = vsel %vm206, %v204, %v208
        %v211 = vadd.f32 %v209, %v210
        %212 = vadd.xlane.f32.xlu0 %v211
        %v213 = vpop.xlane.xlu0 %212
        %v214 = vmul.f32 %v213, 0.00390625
        %v215 = vmul.f32 %v209, %v209
        %v216 = vmul.f32 %v210, %v210
        %v217 = vadd.f32 %v215, %v216
        %218 = vadd.xlane.f32.xlu0 %v217
        %v219 = vpop.xlane.xlu0 %218
        %v220 = vmul.f32 %v219, 0.00390625
        %v221 = vmul.f32 %v214, %v214
        %v222 = vsub.f32 %v220, %v221
        %v223 = vmax.f32 %v222, 0.0
        %v224 = vadd.f32 %v223, 1e-05
        %v225 = vrsqrt.pop %v224
        %v226 = vld [vmem:[%s198] sm:$0xff]
        %v227 = vmul.f32 %v226, %v225
        %v228 = vld [vmem:[%s202] sm:$0xff]
        %v229 = vmul.f32 %v227, %v214
        %v230 = vsub.f32 %v228, %v229
        %232 = vset.pattern.permute.xlu0 0
        %233 = vperm.xlu0 %232, %v227
        %v234 = vpop.permute.xlu0 %233
        %v236 = vmul.f32 %v234, %v209
        %v237 = vmul.f32 %v234, %v210
        %239 = vset.pattern.permute.xlu0 0
        %240 = vperm.xlu0 %239, %v230
        %v241 = vpop.permute.xlu0 %240
        %v243 = vadd.f32 %v236, %v241
        %v244 = vadd.f32 %v237, %v241
        %245 = vst [vmem:[%s189] sm:$0xff] %v243
        %246 = vst [vmem:[%s189 + $0x8] sm:$0xff] %v244
        %s247 = sand.u32 %s103, 1
        %s248 = scalar_lea.sflag [#allocation3], %s247
        %s249 = sand.u32 %s103, 1
        %s250 = smul.addr %s249, 16
        %s251 = scalar_lea.vmem [#allocation2], %s250
        // Predicated region
        $region33: #{tpu_custom_call.1} parent=31 // pred_check
          %p252 = pneg %p113
        $region34: #{tpu_custom_call.1} parent=31 // pred_check_branch
          %254 = sbr.rel (%p252) target = $region36
        $region35: #{tpu_custom_call.1} parent=31 // pred_region
          %s256 = ssub.s32 256, 256
          %257 = vsyncadd %s248, %s256
          %s258 = smul.addr %s17, 2
          %s259 = smul.addr %s258, 128
          %s260 = scalar_lea.hbm %s3, %s259
          %s262 = sshll.u32 %s251, 4
          %s263 = int_to_ptr.vmem [resolvable:$true] %s262
          %265 = dma.vmem_to_hbm [thread:$0]  %s263, 256, %s260, %s248
        $region36: #{tpu_custom_call.1} parent=31 // pred_fallthru
          _
      $region32: #{tpu_custom_call.1} parent=5 // pred_fallthru
        _
      %p266 = scmp.le.s32.totalorder 2, %s12
      // Predicated region
      $region37: #{tpu_custom_call.1} parent=5 // pred_check
        %p267 = pneg %p266
      $region38: #{tpu_custom_call.1} parent=5 // pred_check_branch
        %269 = sbr.rel (%p267) target = $region40
      $region39: #{tpu_custom_call.1} parent=5 // pred_region
        %s270 = ssub.s32 %s12, 2
        // Predicated region
        $region41: #{tpu_custom_call.1} parent=39 // pred_check
          %p271 = pneg %p119
        $region42: #{tpu_custom_call.1} parent=39 // pred_check_branch
          %273 = sbr.rel (%p271) target = $region44
        $region43: #{tpu_custom_call.1} parent=39 // pred_region
          %s274 = sand.u32 %s104, 1
          %s275 = scalar_lea.sflag [#allocation3], %s274
          %s276 = sand.u32 %s104, 1
          %s277 = smul.addr %s276, 16
          %s278 = scalar_lea.vmem [#allocation2], %s277
          %279 = dma.done %s275, 256
        $region44: #{tpu_custom_call.1} parent=39 // pred_fallthru
          _
      $region40: #{tpu_custom_call.1} parent=5 // pred_fallthru
        _
    $region6: #{tpu_custom_call.1} parent=1 // loop_footer
      %s16 = sadd.s32 1, %s12
    $region7: #{tpu_custom_call.1} parent=1 // loop_footer_branch
      %11 = sbr.rel target = $region3
    $region8: #{tpu_custom_call.1} parent=1 // loop_exit
      _
    %280 = vsyncpa [#allocation3], 1
    %s281 = scalar_lea.sflag [#allocation3], 1
    %282 = vsyncpa %s281, 1

</llo_original>
